<compile_context>
chip_gen: v5e
topology: v5e:2x2
jax: 0.10.0
libtpu: 0.0.40
codegen_flags: <defaults>
</compile_context>

<pallas_src>
import functools

import jax
import jax.numpy as jnp
import numpy as np
from jax.experimental import pallas as pl
from jax.experimental.pallas import tpu as pltpu

LANE = 128
SUBLANE = 8
# ~128K pixels per tile: 3ch * 128K * 4B = 1.5 MiB/block; in+out double
# buffered ~= 6 MiB -> inside the default scoped-VMEM budget on v5e/v6e/v7x.
MAX_PIX_TILE = 128 * 1024
MAX_ROWS_TILE = MAX_PIX_TILE // LANE


def _cdiv(a, b):
    return -(-a // b)


def _round_up(x, m):
    return ((x + m - 1) // m) * m


def _is_identity(weight):
    """Concrete check that the (C, C, 1, 1) weight is the identity mix."""
    try:
        w = np.asarray(jax.device_get(weight))
    except Exception:  # traced under jit -> take the general path
        return False
    C = w.shape[0]
    return bool(np.allclose(w.reshape(C, C), np.eye(C)))


def _num_pixel_tiles(total, max_tile, N):
    # Enough total grid steps (>= ~8, >= 2 per batch element) for pipelining
    # and the v7x two-TensorCore split, while capping the per-block VMEM use.
    target = max(2, _cdiv(8, N))
    return max(target, _cdiv(total, max_tile))


def _kernel_rows(w_ref, b_ref, x_ref, o_ref, *, C, identity):
    # w_ref: SMEM (C*C,) f32   b_ref: SMEM (C,) f32
    # x_ref/o_ref: VMEM (1, C, rows_tile, 128) -- pixels on sublanes+lanes.
    for c in range(C):                       # static unroll, C == 3
        if identity:
            acc = x_ref[0, c]
        else:
            acc = x_ref[0, 0] * w_ref[c * C + 0]
            for k in range(1, C):
                acc = acc + x_ref[0, k] * w_ref[c * C + k]
        o_ref[0, c] = (acc + b_ref[c]).astype(o_ref.dtype)


def _kernel_flat(w_ref, b_ref, x_ref, o_ref, *, C, identity):
    # x_ref/o_ref: VMEM (1, C, hw_tile) -- lane-dense fallback layout.
    for c in range(C):
        if identity:
            acc = x_ref[0, c:c + 1, :]
        else:
            acc = x_ref[0, 0:1, :] * w_ref[c * C + 0]
            for k in range(1, C):
                acc = acc + x_ref[0, k:k + 1, :] * w_ref[c * C + k]
        o_ref[0, c:c + 1, :] = (acc + b_ref[c]).astype(o_ref.dtype)


def mean_shift(x, weight, bias, *, identity_weight=None):
    """MeanShift forward: out[n,c,h,w] = sum_k W[c,k]*x[n,k,h,w] + b[c].

    x: (N, 3, H, W) float NCHW; weight: (3, 3, 1, 1); bias: (3,).
    identity_weight: force/skip the identity fast path; auto-detected when the
      weight is a concrete array (it is eye(3) for the real MeanShift).
    """
    if not jnp.issubdtype(x.dtype, jnp.floating):
        raise TypeError(f"mean_shift expects a floating-point input, got {x.dtype}")
    N, C, H, W = x.shape
    HW = H * W
    if identity_weight is None:
        identity_weight = _is_identity(weight)

    w_flat = weight.reshape(C * C).astype(jnp.float32)  # scalar-prefetch -> SMEM
    b_flat = bias.reshape(C).astype(jnp.float32)        # scalar-prefetch -> SMEM

    if HW % LANE == 0:
        # Preferred layout: pixels on the sublane axis, 8/8-dense vregs.
        R = HW // LANE
        x_v = x.reshape(N, C, R, LANE)                  # contiguous reshape, no copy
        if R <= SUBLANE:
            rows_tile = R                               # == full dim, always legal
        else:
            n_tiles = _num_pixel_tiles(R, MAX_ROWS_TILE, N)
            rows_tile = min(MAX_ROWS_TILE,
                            max(SUBLANE, _round_up(_cdiv(R, n_tiles), SUBLANE)))
        grid = (N, _cdiv(R, rows_tile))
        block = (1, C, rows_tile, LANE)
        index_map = lambda n, t, w_s, b_s: (n, 0, t, 0)
        kernel = functools.partial(_kernel_rows, C=C, identity=identity_weight)
    else:
        # Fallback: (N, C, HW) lane-dense layout; ragged last tile is masked
        # by Pallas (no host-side pad or output slice).
        x_v = x.reshape(N, C, HW)
        if HW <= LANE:
            hw_tile = HW                                # == full dim, always legal
        else:
            n_tiles = _num_pixel_tiles(HW, MAX_PIX_TILE, N)
            hw_tile = min(MAX_PIX_TILE,
                          max(LANE, _round_up(_cdiv(HW, n_tiles), LANE)))
        grid = (N, _cdiv(HW, hw_tile))
        block = (1, C, hw_tile)
        index_map = lambda n, t, w_s, b_s: (n, 0, t)
        kernel = functools.partial(_kernel_flat, C=C, identity=identity_weight)

    out_v = pl.pallas_call(
        kernel,
        out_shape=jax.ShapeDtypeStruct(x_v.shape, x.dtype),
        grid_spec=pltpu.PrefetchScalarGridSpec(
            num_scalar_prefetch=2,
            grid=grid,
            in_specs=[pl.BlockSpec(block, index_map)],
            out_specs=pl.BlockSpec(block, index_map),
        ),
        compiler_params=pltpu.CompilerParams(
            dimension_semantics=("parallel", "parallel"),
        ),
    )(w_flat, b_flat, x_v)

    return out_v.reshape(N, C, H, W)


def make_meanshift_params(mean_rgb, sub):
    """Deterministic params matching MeanShift.__init__: identity 1x1 conv + bias."""
    sign = -1.0 if sub else 1.0
    weight = jnp.eye(3, dtype=jnp.float32).reshape(3, 3, 1, 1)
    bias = sign * jnp.asarray(mean_rgb, dtype=jnp.float32)
    return weight, bias


if __name__ == "__main__":
    key = jax.random.PRNGKey(0)
    N, C, H, W = 2, 3, 16, 16  # MeanShift is hard-wired to 3 channels (RGB)
    x = jax.random.uniform(key, (N, C, H, W), dtype=jnp.float32)

    mean_rgb = (0.4488, 0.4371, 0.4040)
    weight, bias = make_meanshift_params(mean_rgb, sub=True)

    # 1) Identity fast path (the real MeanShift), HW % 128 == 0 -> row layout.
    out = jax.block_until_ready(mean_shift(x, weight, bias))
    ref = x + bias.reshape(1, C, 1, 1)
    assert out.shape == (N, C, H, W)
    assert jnp.allclose(out, ref, atol=1e-6), "identity path mismatch"

    # 2) General (non-identity weight) path, same layout.
    w2 = jax.random.normal(jax.random.PRNGKey(1), (3, 3, 1, 1), dtype=jnp.float32)
    out2 = jax.block_until_ready(mean_shift(x, w2, bias))
    ref2 = jnp.einsum("ck,nkhw->nchw", w2.reshape(3, 3), x) + bias.reshape(1, C, 1, 1)
    assert jnp.allclose(out2, ref2, atol=1e-5), "general path mismatch"

    # 3) HW not a multiple of 128 -> flat fallback layout with a ragged last
    #    tile (exercises Pallas OOB-write masking; no host pad/slice).
    x3 = jax.random.uniform(jax.random.PRNGKey(2), (N, C, 13, 15), dtype=jnp.float32)
    out3 = jax.block_until_ready(mean_shift(x3, w2, bias))
    ref3 = jnp.einsum("ck,nkhw->nchw", w2.reshape(3, 3), x3) + bias.reshape(1, C, 1, 1)
    assert jnp.allclose(out3, ref3, atol=1e-5), "ragged fallback path mismatch"

    print("KERNEL_OK")
</pallas_src>

<mosaic_0001>
module attributes {stable_mosaic.version = 11 : i64} {
  func.func @_kernel_rows(%arg0: i32, %arg1: i32, %arg2: memref<9xf32, #tpu.memory_space<smem>>, %arg3: memref<3xf32, #tpu.memory_space<smem>>, %arg4: memref<1x3x2x128xf32, #tpu.memory_space<vmem>>, %arg5: memref<1x3x2x128xf32, #tpu.memory_space<vmem>>) attributes {dimension_semantics = [#tpu.dimension_semantics<parallel>, #tpu.dimension_semantics<parallel>], iteration_bounds = array<i64: 2, 1>, scalar_prefetch = 2 : i64, scratch_operands = 0 : i64, tpu.core_type = #tpu.core_type<tc>, window_params = [{transform_indices = @transform_0, window_bounds = array<i64: 1, 3, 2, 128>}, {transform_indices = @transform_1, window_bounds = array<i64: 1, 3, 2, 128>}]} {
    %c0 = arith.constant 0 : index
    %c0_0 = arith.constant 0 : index
    %c0_1 = arith.constant 0 : index
    %c0_2 = arith.constant 0 : index
    %0 = vector.load %arg4[%c0, %c0_0, %c0_1, %c0_2] : memref<1x3x2x128xf32, #tpu.memory_space<vmem>>, vector<1x1x2x128xf32>
    %1 = vector.shape_cast %0 : vector<1x1x2x128xf32> to vector<2x128xf32>
    %c0_3 = arith.constant 0 : index
    %2 = memref.load %arg3[%c0_3] : memref<3xf32, #tpu.memory_space<smem>>
    %3 = vector.broadcast %2 : f32 to vector<2x128xf32>
    %4 = arith.addf %1, %3 : vector<2x128xf32>
    %c0_4 = arith.constant 0 : index
    %c0_5 = arith.constant 0 : index
    %c0_6 = arith.constant 0 : index
    %c0_7 = arith.constant 0 : index
    %5 = vector.load %arg5[%c0_4, %c0_5, %c0_6, %c0_7] : memref<1x3x2x128xf32, #tpu.memory_space<vmem>>, vector<1x1x2x128xf32>
    %6 = vector.shape_cast %5 : vector<1x1x2x128xf32> to vector<2x128xf32>
    %7 = vector.shape_cast %4 : vector<2x128xf32> to vector<1x1x2x128xf32>
    tpu.vector_store %arg5[%c0_4, %c0_5, %c0_6, %c0_7], %7 {strides = array<i32>} : memref<1x3x2x128xf32, #tpu.memory_space<vmem>>, vector<1x1x2x128xf32>,
    %c0_8 = arith.constant 0 : index
    %c1 = arith.constant 1 : index
    %c0_9 = arith.constant 0 : index
    %c0_10 = arith.constant 0 : index
    %8 = vector.load %arg4[%c0_8, %c1, %c0_9, %c0_10] : memref<1x3x2x128xf32, #tpu.memory_space<vmem>>, vector<1x1x2x128xf32>
    %9 = vector.shape_cast %8 : vector<1x1x2x128xf32> to vector<2x128xf32>
    %c1_11 = arith.constant 1 : index
    %10 = memref.load %arg3[%c1_11] : memref<3xf32, #tpu.memory_space<smem>>
    %11 = vector.broadcast %10 : f32 to vector<2x128xf32>
    %12 = arith.addf %9, %11 : vector<2x128xf32>
    %c0_12 = arith.constant 0 : index
    %c1_13 = arith.constant 1 : index
    %c0_14 = arith.constant 0 : index
    %c0_15 = arith.constant 0 : index
    %13 = vector.load %arg5[%c0_12, %c1_13, %c0_14, %c0_15] : memref<1x3x2x128xf32, #tpu.memory_space<vmem>>, vector<1x1x2x128xf32>
    %14 = vector.shape_cast %13 : vector<1x1x2x128xf32> to vector<2x128xf32>
    %15 = vector.shape_cast %12 : vector<2x128xf32> to vector<1x1x2x128xf32>
    tpu.vector_store %arg5[%c0_12, %c1_13, %c0_14, %c0_15], %15 {strides = array<i32>} : memref<1x3x2x128xf32, #tpu.memory_space<vmem>>, vector<1x1x2x128xf32>,
    %c0_16 = arith.constant 0 : index
    %c2 = arith.constant 2 : index
    %c0_17 = arith.constant 0 : index
    %c0_18 = arith.constant 0 : index
    %16 = vector.load %arg4[%c0_16, %c2, %c0_17, %c0_18] : memref<1x3x2x128xf32, #tpu.memory_space<vmem>>, vector<1x1x2x128xf32>
    %17 = vector.shape_cast %16 : vector<1x1x2x128xf32> to vector<2x128xf32>
    %c2_19 = arith.constant 2 : index
    %18 = memref.load %arg3[%c2_19] : memref<3xf32, #tpu.memory_space<smem>>
    %19 = vector.broadcast %18 : f32 to vector<2x128xf32>
    %20 = arith.addf %17, %19 : vector<2x128xf32>
    %c0_20 = arith.constant 0 : index
    %c2_21 = arith.constant 2 : index
    %c0_22 = arith.constant 0 : index
    %c0_23 = arith.constant 0 : index
    %21 = vector.load %arg5[%c0_20, %c2_21, %c0_22, %c0_23] : memref<1x3x2x128xf32, #tpu.memory_space<vmem>>, vector<1x1x2x128xf32>
    %22 = vector.shape_cast %21 : vector<1x1x2x128xf32> to vector<2x128xf32>
    %23 = vector.shape_cast %20 : vector<2x128xf32> to vector<1x1x2x128xf32>
    tpu.vector_store %arg5[%c0_20, %c2_21, %c0_22, %c0_23], %23 {strides = array<i32>} : memref<1x3x2x128xf32, #tpu.memory_space<vmem>>, vector<1x1x2x128xf32>,
    return
  }
  func.func @transform_0(%arg0: i32, %arg1: i32, %arg2: memref<9xf32, #tpu.memory_space<smem>>, %arg3: memref<3xf32, #tpu.memory_space<smem>>) -> (i32, i32, i32, i32) {
    %c0_i32 = arith.constant 0 : i32
    %c0_i32_0 = arith.constant 0 : i32
    %c0_i32_1 = arith.constant 0 : i32
    return %arg0, %c0_i32, %arg1, %c0_i32_0 : i32, i32, i32, i32
  }
  func.func @transform_1(%arg0: i32, %arg1: i32, %arg2: memref<9xf32, #tpu.memory_space<smem>>, %arg3: memref<3xf32, #tpu.memory_space<smem>>) -> (i32, i32, i32, i32) {
    %c0_i32 = arith.constant 0 : i32
    %c0_i32_0 = arith.constant 0 : i32
    %c0_i32_1 = arith.constant 0 : i32
    return %arg0, %c0_i32, %arg1, %c0_i32_0 : i32, i32, i32, i32
  }
}

</mosaic_0001>

<llo_original>
// kernel: tpu_custom_call.1
$region0: #{tpu_custom_call.1}
  #allocation0 [shape = 'u32[]', space=smem, size = 0x4, offset = 0x4, fixed_abs, tag = 'smem constant byte address 0x4 - core index']
  #allocation1 [shape = 'u32[72,128]{1,0:T(1,128)}', space=vmem, size = 0x9000, scoped, tag = 'internal scratch']
  #allocation2 [shape = 's32[1]{0}', space=sflag, size = 0x4, scoped, tag = 'scoped memory for tpu_custom_call.1']
  #allocation3 [shape = 'u8[512]{0}', space=smem, size = 0x200, scoped, tag = 'prefetched SMEM operand 0']
  #allocation4 [shape = 'u8[512]{0}', space=smem, size = 0x200, scoped, tag = 'prefetched SMEM operand 1']
  %s0 = inlined_call_operand.hbm [shape: f32[9], index: 0, kind: input, shape index: {}]
  %s1 = inlined_call_operand.hbm [shape: f32[3], index: 1, kind: input, shape index: {}]
  %s2 = inlined_call_operand.hbm [shape: f32[2,3,2,128], index: 2, kind: input, shape index: {}]
  %s3 = inlined_call_operand.hbm [shape: f32[2,3,2,128], index: 3, kind: output, shape index: {}]
  %s4 = sld [smem:[#allocation0]]
  $region41: #{tpu_custom_call.1} parent=0
    _
  %s6 = ssub.s32 1, %s4
  %s7 = scalar_select 0, %s6, %s4
  %s9 = sshll.u32 %s0, 4
  %s10 = int_to_ptr.hbm [resolvable:$true] %s9
  %12 = dma.hbm_to_smem %s10, 16, [#allocation3], [#allocation2]
  %s14 = sshll.u32 %s1, 4
  %s15 = int_to_ptr.hbm [resolvable:$true] %s14
  %17 = dma.hbm_to_smem %s15, 16, [#allocation4], [#allocation2]
  %19 = dma.done [#allocation2], 32
  %20 = sfence
  $region1: #{tpu_custom_call.1} parent=0
    #allocation5 [shape = 'u8[6144]{0}', space=vmem, size = 0x1800, scoped, tag = 'input window, operand 2']
    #allocation6 [shape = 's32[2]{0}', space=sflag, size = 0x8, scoped, tag = 'scoped memory for tpu_custom_call.1']
    #allocation7 [shape = 's32[2]{0}', space=sflag, size = 0x8, scoped, tag = 'scoped memory for tpu_custom_call.1']
    #allocation8 [shape = 'u8[6144]{0}', space=vmem, size = 0x1800, scoped, tag = 'output window, operand 0']
    %21 = vsyncpa [#allocation6], 0
    %s22 = scalar_lea.sflag [#allocation6], 1
    %23 = vsyncpa %s22, 0
    %24 = vsyncpa [#allocation7], 0
    %s25 = scalar_lea.sflag [#allocation7], 1
    %26 = vsyncpa %s25, 0
    loop: start=0, step=1, limit=4
    $region2: #{tpu_custom_call.1} parent=1 // loop_pre_header
      _
    $region3: #{tpu_custom_call.1} parent=1 // loop_header
      %s28 = sphi 0, %s32
      %p29 = scmp.ge.s32.totalorder %s28, 4
      %s35 = sphi 0, %s47
      %s36 = sphi 0, %s43
      %s37 = sphi 0, %s35
      %s38 = sphi 0, %s36
      %s39 = sphi 0, %s37
      %s40 = sphi 0, %s38
      %s52 = sphi 0, %s54
      %s55 = sphi 0, %s52
      %s56 = sphi 0, %s55
      %s72 = sphi 0, %s56
      %s80 = sphi 0, %s82
      %s83 = sphi 0, %s80
      %s84 = sphi 0, %s83
      %s100 = sphi 0, %s84
    $region4: #{tpu_custom_call.1} parent=1 // loop_header_branch
      %31 = sbr.rel (%p29) target = $region8
    $region5: #{tpu_custom_call.1} parent=1 // loop_body
      %s33 = ssub.s32 %s28, 1
      %s34 = ssub.s32 %s28, 2
      %s41 = sadd.s32 1, %s36
      %p42 = scmp.ge.s32.totalorder %s41, 1
      %s43 = scalar_select %p42, 0, %s41
      %s44 = sadd.s32 1, %s35
      %s45 = scalar_select %p42, %s44, %s35
      %p46 = scmp.ge.s32.totalorder %s45, 2
      %s47 = scalar_select %p46, 0, %s45
      %s48 = ssub.s32 %s35, %s47
      %s49 = ssub.s32 %s36, %s43
      %s50 = sor.u32 %s48, %s49
      %p51 = scmp.eq.s32.totalorder %s50, 0
      %s53 = sadd.s32 %s52, 1
      %s54 = scalar_select %p51, %s52, %s53
      %p57 = pneg %p51
      %p58 = scmp.eq.s32.totalorder %s28, 1
      %p59 = por %p57, %p58
      %p60 = scmp.ne.s32.totalorder %s52, %s55
      %p61 = scmp.eq.s32.totalorder %s28, 0
      %p62 = por %p60, %p61
      %p63 = scmp.ne.s32.totalorder %s52, %s55
      %p64 = scmp.eq.s32.totalorder %s33, 1
      %p65 = por %p63, %p64
      %p66 = scmp.ne.s32.totalorder %s55, %s56
      %p67 = scmp.eq.s32.totalorder %s33, 0
      %p68 = por %p66, %p67
      %p69 = scmp.ne.s32.totalorder %s55, %s56
      %p70 = scmp.eq.s32.totalorder %s34, 1
      %p71 = por %p69, %p70
      %p73 = scmp.ne.s32.totalorder %s56, %s72
      %p74 = scmp.eq.s32.totalorder %s34, 0
      %p75 = por %p73, %p74
      %s76 = ssub.s32 %s35, %s47
      %s77 = ssub.s32 %s36, %s43
      %s78 = sor.u32 %s76, %s77
      %p79 = scmp.eq.s32.totalorder %s78, 0
      %s81 = sadd.s32 %s80, 1
      %s82 = scalar_select %p79, %s80, %s81
      %p85 = pneg %p79
      %p86 = scmp.eq.s32.totalorder %s28, 1
      %p87 = por %p85, %p86
      %p88 = scmp.ne.s32.totalorder %s80, %s83
      %p89 = scmp.eq.s32.totalorder %s28, 0
      %p90 = por %p88, %p89
      %p91 = scmp.ne.s32.totalorder %s80, %s83
      %p92 = scmp.eq.s32.totalorder %s33, 1
      %p93 = por %p91, %p92
      %p94 = scmp.ne.s32.totalorder %s83, %s84
      %p95 = scmp.eq.s32.totalorder %s33, 0
      %p96 = por %p94, %p95
      %p97 = scmp.ne.s32.totalorder %s83, %s84
      %p98 = scmp.eq.s32.totalorder %s34, 1
      %p99 = por %p97, %p98
      %p101 = scmp.ne.s32.totalorder %s84, %s100
      %p102 = scmp.eq.s32.totalorder %s34, 0
      %p103 = por %p101, %p102
      %p104 = scmp.le.s32.totalorder 1, %s28
      %p105 = scmp.lt.s32.totalorder %s28, 3
      %p106 = pnand %p104, %p105
      %p107 = pneg %p106
      // Predicated region
      $region9: #{tpu_custom_call.1} parent=5 // pred_check
        _
      $region10: #{tpu_custom_call.1} parent=5 // pred_check_branch
        %109 = sbr.rel (%p106) target = $region12
      $region11: #{tpu_custom_call.1} parent=5 // pred_region
        %s110 = ssub.s32 %s28, 1
      $region12: #{tpu_custom_call.1} parent=5 // pred_fallthru
        _
      %p111 = scmp.lt.s32.totalorder %s28, 2
      // Predicated region
      $region13: #{tpu_custom_call.1} parent=5 // pred_check
        %p112 = pneg %p111
      $region14: #{tpu_custom_call.1} parent=5 // pred_check_branch
        %114 = sbr.rel (%p112) target = $region16
      $region15: #{tpu_custom_call.1} parent=5 // pred_region
        // Predicated region
        $region17: #{tpu_custom_call.1} parent=15 // pred_check
          %p115 = pneg %p62
        $region18: #{tpu_custom_call.1} parent=15 // pred_check_branch
          %117 = sbr.rel (%p115) target = $region20
        $region19: #{tpu_custom_call.1} parent=15 // pred_region
          %s118 = sand.u32 %s52, 1
          %s119 = scalar_lea.sflag [#allocation6], %s118
          %s120 = sand.u32 %s52, 1
          %s121 = smul.addr %s120, 6
          %s122 = scalar_lea.vmem [#allocation5], %s121
          %124 = vsyncadd %s119, 0
          %s125 = smul.addr %s35, 3
          %s126 = sadd.s32 %s36, %s125
          %s127 = smul.addr %s126, 2
          %s128 = scalar_lea.hbm %s2, %s127
          %s129 = sshll.u32 %s128, 4
          %s130 = int_to_ptr.hbm [resolvable:$true] %s129
          %s131 = sshll.u32 %s122, 4
          %s132 = int_to_ptr.vmem [resolvable:$true] %s131
          %137 = dma.hbm_to_vmem [thread:$0]  %s130, 96, %s132, %s119, 32, 32, 2
        $region20: #{tpu_custom_call.1} parent=15 // pred_fallthru
          _
      $region16: #{tpu_custom_call.1} parent=5 // pred_fallthru
        _
      %p138 = scmp.le.s32.totalorder 1, %s28
      %p139 = scmp.lt.s32.totalorder %s28, 3
      %p140 = pnand %p138, %p139
      %p141 = pneg %p140
      // Predicated region
      $region21: #{tpu_custom_call.1} parent=5 // pred_check
        _
      $region22: #{tpu_custom_call.1} parent=5 // pred_check_branch
        %143 = sbr.rel (%p140) target = $region24
      $region23: #{tpu_custom_call.1} parent=5 // pred_region
        %s144 = ssub.s32 %s28, 1
        %s145 = sand.u32 %s55, 1
        %s146 = scalar_lea.sflag [#allocation6], %s145
        %s147 = sand.u32 %s55, 1
        %s148 = smul.addr %s147, 6
        %s149 = scalar_lea.vmem [#allocation5], %s148
        // Predicated region
        $region25: #{tpu_custom_call.1} parent=23 // pred_check
          %p150 = pneg %p68
        $region26: #{tpu_custom_call.1} parent=23 // pred_check_branch
          %152 = sbr.rel (%p150) target = $region28
        $region27: #{tpu_custom_call.1} parent=23 // pred_region
          %154 = dma.done %s146, 96
        $region28: #{tpu_custom_call.1} parent=23 // pred_fallthru
          _
        %s155 = sand.u32 %s55, 1
        %s156 = scalar_lea.sflag [#allocation6], %s155
        %s157 = sand.u32 %s55, 1
        %s158 = smul.addr %s157, 6
        %s159 = scalar_lea.vmem [#allocation5], %s158
        %p160 = pneg %p68
        %p161 = pneg %p65
        %p162 = pneg %p96
        %p163 = pneg %p93
        %s164 = sand.u32 %s83, 1
        %s165 = scalar_lea.sflag [#allocation7], %s164
        %s166 = sand.u32 %s83, 1
        %s167 = smul.addr %s166, 6
        %s168 = scalar_lea.vmem [#allocation8], %s167
        %v169 = vld [vmem:[%s149] sm:$0x3]
        %s170 = sld [smem:[#allocation4]]
        %v171 = vstv %s170
        %v172 = vadd.f32 %v169, %v171
        %173 = vst [vmem:[%s168] sm:$0x3] %v172
        %s174 = scalar_lea.vmem %s149, 2 [#allocation5]
        %v175 = vld [vmem:[%s174] sm:$0x3]
        %s176 = sld [smem:[#allocation4 + $0x1]]
        %v177 = vstv %s176
        %v178 = vadd.f32 %v175, %v177
        %s179 = scalar_lea.vmem %s168, 2 [#allocation8]
        %180 = vst [vmem:[%s179] sm:$0x3] %v178
        %s181 = scalar_lea.vmem %s149, 4 [#allocation5]
        %v182 = vld [vmem:[%s181] sm:$0x3]
        %s183 = sld [smem:[#allocation4 + $0x2]]
        %v184 = vstv %s183
        %v185 = vadd.f32 %v182, %v184
        %s186 = scalar_lea.vmem %s168, 4 [#allocation8]
        %187 = vst [vmem:[%s186] sm:$0x3] %v185
        %s188 = sand.u32 %s83, 1
        %s189 = scalar_lea.sflag [#allocation7], %s188
        %s190 = sand.u32 %s83, 1
        %s191 = smul.addr %s190, 6
        %s192 = scalar_lea.vmem [#allocation8], %s191
        // Predicated region
        $region29: #{tpu_custom_call.1} parent=23 // pred_check
          %p193 = pneg %p93
        $region30: #{tpu_custom_call.1} parent=23 // pred_check_branch
          %195 = sbr.rel (%p193) target = $region32
        $region31: #{tpu_custom_call.1} parent=23 // pred_region
          %197 = vsyncadd %s189, 0
          %s198 = smul.addr %s37, 3
          %s199 = sadd.s32 %s38, %s198
          %s200 = smul.addr %s199, 2
          %s201 = scalar_lea.hbm %s3, %s200
          %s202 = sshll.u32 %s192, 4
          %s203 = int_to_ptr.vmem [resolvable:$true] %s202
          %s204 = sshll.u32 %s201, 4
          %s205 = int_to_ptr.hbm [resolvable:$true] %s204
          %210 = dma.vmem_to_hbm [thread:$0]  %s203, 96, %s205, %s189, 32, 32, 2
        $region32: #{tpu_custom_call.1} parent=23 // pred_fallthru
          _
      $region24: #{tpu_custom_call.1} parent=5 // pred_fallthru
        _
      %p211 = scmp.le.s32.totalorder 2, %s28
      // Predicated region
      $region33: #{tpu_custom_call.1} parent=5 // pred_check
        %p212 = pneg %p211
      $region34: #{tpu_custom_call.1} parent=5 // pred_check_branch
        %214 = sbr.rel (%p212) target = $region36
      $region35: #{tpu_custom_call.1} parent=5 // pred_region
        %s215 = ssub.s32 %s28, 2
        // Predicated region
        $region37: #{tpu_custom_call.1} parent=35 // pred_check
          %p216 = pneg %p99
        $region38: #{tpu_custom_call.1} parent=35 // pred_check_branch
          %218 = sbr.rel (%p216) target = $region40
        $region39: #{tpu_custom_call.1} parent=35 // pred_region
          %s219 = sand.u32 %s84, 1
          %s220 = scalar_lea.sflag [#allocation7], %s219
          %s221 = sand.u32 %s84, 1
          %s222 = smul.addr %s221, 6
          %s223 = scalar_lea.vmem [#allocation8], %s222
          %225 = dma.done %s220, 96
        $region40: #{tpu_custom_call.1} parent=35 // pred_fallthru
          _
      $region36: #{tpu_custom_call.1} parent=5 // pred_fallthru
        _
    $region6: #{tpu_custom_call.1} parent=1 // loop_footer
      %s32 = sadd.s32 1, %s28
    $region7: #{tpu_custom_call.1} parent=1 // loop_footer_branch
      %27 = sbr.rel target = $region3
    $region8: #{tpu_custom_call.1} parent=1 // loop_exit
      _
    %226 = vsyncpa [#allocation6], 1
    %s227 = scalar_lea.sflag [#allocation6], 1
    %228 = vsyncpa %s227, 1
    %229 = vsyncpa [#allocation7], 1
    %s230 = scalar_lea.sflag [#allocation7], 1
    %231 = vsyncpa %s230, 1

</llo_original>
